<compile_context>
chip_gen: v7x
topology: tpu7x:2x2x1
jax: 0.10.0
libtpu: 0.0.40
codegen_flags: <defaults>
</compile_context>

<pallas_src>
import functools

import jax
import jax.numpy as jnp
from jax import lax
from jax.experimental import pallas as pl
from jax.experimental.pallas import tpu as pltpu

# ---------------------------------------------------------------------------
# Tiling / hardware-derived sizing.

_MAX_TK = 8192                 # soft cap on the lane-aligned K tile (keeps >=2
                               # grid steps for pipelining when K is huge)
_TM_ROWS = 256                 # output row block for the megacore (v7x) path
_ROW_BLOCK_MIN_M = 512         # row-parallelize only when >= 2 row blocks


def _vmem_caps():
    """(tile-budget bytes, vmem_limit_bytes) derived from the chip's VMEM."""
    cap = None
    try:
        cap = int(getattr(pltpu.get_tpu_info(), "vmem_capacity_bytes", 0)) or None
    except Exception:
        cap = None
    if cap is None:
        cap = 64 * 1024 * 1024              # conservative (v7x-sized) fallback
    # Leave headroom for Mosaic-internal scratch / semaphores / metadata:
    # ~48 MiB working set on v7x (64 MiB physical), ~108 MiB on v5e/v6e (128).
    limit = max(16 * 1024 * 1024,
                min(cap - 16 * 1024 * 1024, int(cap * 0.85)))
    budget = int(limit * 0.8)
    return budget, limit


def _num_tensorcores():
    """2 on megacore-style chips (v7x has 2 TCs/chip), else 1 (v5e/v6e)."""
    try:
        kind = jax.devices()[0].device_kind.lower()
    except Exception:
        return 1
    return 2 if ("v7" in kind or "7x" in kind) else 1


def _use_row_blocks(M, force=False):
    if M % _TM_ROWS != 0 or M < _ROW_BLOCK_MIN_M:
        return False
    return force or _num_tensorcores() >= 2


def _choose_tk(stream_rows, K, itemsize, resident_bytes, budget, max_tk=None):
    """Largest lane-aligned K tile whose feature stream fits the VMEM budget.

    Counts 3 stream buffers (2 for the double-buffered DMA + 1 for the
    masked-tail / MXU-feed temp) on top of `resident_bytes` (accumulator and
    style buffers).  If all of K fits in one tile we use a full-extent block
    (always legal, no tail masking); otherwise the tile is a multiple of 128
    and the partial last tile is masked in-kernel on the final step only.
    """
    per_k = 3 * stream_rows * itemsize
    avail = max(budget - resident_bytes, 128 * per_k)
    tk = (int(avail // per_k) // 128) * 128
    tk = max(128, min(tk, _MAX_TK))
    if max_tk is not None:
        tk = min(tk, max(128, (int(max_tk) // 128) * 128))
    return K if K <= tk else tk


# ---------------------------------------------------------------------------
# In-kernel helpers.

def _masked(f, k, k_total, tk):
    """Zero out lanes past the end of K in the (partial) last tile."""
    col = lax.broadcasted_iota(jnp.int32, f.shape, 1)
    return jnp.where(col < (k_total - k * tk), f, jnp.zeros_like(f))


def _ff_t(a, b):
    """a @ b.T without materializing a transpose (contract lane axis of both)."""
    return lax.dot_general(a, b, dimension_numbers=(((1,), (1,)), ((), ())),
                           preferred_element_type=jnp.float32)


def _accumulate(gram_ref, fl, fr, k, nk, *, k_total, tk, mask_tail, symmetric):
    """gram += fl @ fr.T with the tail mask applied only on the last K step."""
    if not mask_tail:
        gram_ref[...] += _ff_t(fl, fr)
        return

    @pl.when(k < nk - 1)
    def _full():
        gram_ref[...] += _ff_t(fl, fr)

    @pl.when(k == nk - 1)
    def _tail():
        flm = _masked(fl, k, k_total, tk)
        frm = flm if symmetric else _masked(fr, k, k_total, tk)
        gram_ref[...] += _ff_t(flm, frm)


def _call_with_feature_spec(build, block_shape, index_map, want_deep):
    """Invoke `build(feature_spec)`, requesting a 3-deep pipeline for
    mem-bound small-M cases when the installed Pallas supports pl.Buffered on
    pallas_call BlockSpecs; otherwise use the default double buffering."""
    if want_deep:
        try:
            spec = pl.BlockSpec(block_shape, index_map,
                                pipeline_mode=pl.Buffered(3))
            return build(spec)
        except Exception:
            pass  # unsupported on this version/path -> default 2-deep pipeline
    return build(pl.BlockSpec(block_shape, index_map))


# ---------------------------------------------------------------------------
# Kernels: 1-D grid over K tiles (gram accumulated in the resident output).

def _gram_kernel(f_ref, gram_ref, *, inv_norm, k_total, tk, mask_tail):
    k = pl.program_id(0)
    nk = pl.num_programs(0)

    @pl.when(k == 0)
    def _init():
        gram_ref[...] = jnp.zeros_like(gram_ref)

    f = f_ref[...]
    _accumulate(gram_ref, f, f, k, nk, k_total=k_total, tk=tk,
                mask_tail=mask_tail, symmetric=True)

    @pl.when(k == nk - 1)
    def _finalize():
        gram_ref[...] = gram_ref[...] * inv_norm


def _gram_loss_kernel(f_ref, style_hbm, gram_ref, loss_ref,
                      style_vmem, style_sem, *,
                      inv_norm, inv_mm, k_total, tk, mask_tail):
    k = pl.program_id(0)
    nk = pl.num_programs(0)

    @pl.when(k == 0)
    def _init():
        gram_ref[...] = jnp.zeros_like(gram_ref)
        # Single-buffered style load from HBM, overlapped with the K loop.
        pltpu.make_async_copy(style_hbm, style_vmem, style_sem.at[0]).start()

    f = f_ref[...]
    _accumulate(gram_ref, f, f, k, nk, k_total=k_total, tk=tk,
                mask_tail=mask_tail, symmetric=True)

    @pl.when(k == nk - 1)
    def _finalize():
        pltpu.make_async_copy(style_hbm, style_vmem, style_sem.at[0]).wait()
        g = gram_ref[...] * inv_norm
        gram_ref[...] = g
        diff = g - style_vmem[...].astype(jnp.float32)
        loss_ref[0, 0] = jnp.sum(diff * diff) * inv_mm   # mean -> SMEM scalar


# ---------------------------------------------------------------------------
# Kernels: 2-D grid (row-parallel output blocks x K tiles), 2-TC chips only.
# A single full-M (M, tk) feature tile is streamed; the (tm, tk) LHS row block
# is sliced out of it in-kernel (no duplicated LHS stream from HBM).

def _gram_rows_kernel(f_ref, gram_ref, *, tm, inv_norm, k_total, tk, mask_tail):
    i = pl.program_id(0)
    k = pl.program_id(1)
    nk = pl.num_programs(1)

    @pl.when(k == 0)
    def _init():
        gram_ref[...] = jnp.zeros_like(gram_ref)

    row0 = pl.multiple_of(i * tm, tm)
    fr = f_ref[...]
    fl = f_ref[pl.ds(row0, tm), :]
    _accumulate(gram_ref, fl, fr, k, nk, k_total=k_total, tk=tk,
                mask_tail=mask_tail, symmetric=False)

    @pl.when(k == nk - 1)
    def _finalize():
        gram_ref[...] = gram_ref[...] * inv_norm


def _gram_loss_rows_kernel(f_ref, style_ref, gram_ref, part_ref, *,
                           tm, inv_norm, k_total, tk, mask_tail):
    i = pl.program_id(0)
    k = pl.program_id(1)
    nk = pl.num_programs(1)

    @pl.when(k == 0)
    def _init():
        gram_ref[...] = jnp.zeros_like(gram_ref)

    row0 = pl.multiple_of(i * tm, tm)
    fr = f_ref[...]
    fl = f_ref[pl.ds(row0, tm), :]
    _accumulate(gram_ref, fl, fr, k, nk, k_total=k_total, tk=tk,
                mask_tail=mask_tail, symmetric=False)

    @pl.when(k == nk - 1)
    def _finalize():
        g = gram_ref[...] * inv_norm
        gram_ref[...] = g
        diff = g - style_ref[...].astype(jnp.float32)
        # Per-row-block squared-error sum, written lane-dense (unmasked vst).
        # Reduced in the wrapper -> megacore-safe (blocks are disjoint in i).
        part_ref[...] = jnp.full(part_ref.shape, jnp.sum(diff * diff),
                                 dtype=jnp.float32)


# ---------------------------------------------------------------------------
# Wrappers around pallas_call.

def _gram_call(features, norm, *, force_row_blocks=False, max_tk=None):
    """features: (M, K) -> normalized gram (M, M) float32 (Pallas)."""
    M, K = features.shape
    itemsize = features.dtype.itemsize
    budget, vmem_limit = _vmem_caps()
    inv_norm = 1.0 / float(norm)

    if not _use_row_blocks(M, force_row_blocks):
        residents = 3 * M * M * 4                # 2 output buffers + 1 f32 temp
        tk = _choose_tk(M, K, itemsize, residents, budget, max_tk)
        nk = pl.cdiv(K, tk)
        mask_tail = (K % tk) != 0
        kernel = functools.partial(_gram_kernel, inv_norm=inv_norm,
                                   k_total=K, tk=tk, mask_tail=mask_tail)

        def build(feat_spec):
            return pl.pallas_call(
                kernel,
                out_shape=jax.ShapeDtypeStruct((M, M), jnp.float32),
                grid_spec=pltpu.PrefetchScalarGridSpec(
                    num_scalar_prefetch=0,
                    grid=(nk,),
                    in_specs=[feat_spec],
                    out_specs=pl.BlockSpec((M, M), lambda k: (0, 0)),
                ),
                compiler_params=pltpu.CompilerParams(
                    dimension_semantics=("arbitrary",),
                    vmem_limit_bytes=vmem_limit),
            )(features)

        return _call_with_feature_spec(build, (M, tk), lambda k: (0, k),
                                       want_deep=(M <= 128 and nk >= 3))

    tm = _TM_ROWS
    ni = M // tm
    residents = 3 * tm * M * 4
    tk = _choose_tk(M, K, itemsize, residents, budget, max_tk)
    nk = pl.cdiv(K, tk)
    mask_tail = (K % tk) != 0
    kernel = functools.partial(_gram_rows_kernel, tm=tm, inv_norm=inv_norm,
                               k_total=K, tk=tk, mask_tail=mask_tail)
    return pl.pallas_call(
        kernel,
        out_shape=jax.ShapeDtypeStruct((M, M), jnp.float32),
        grid_spec=pltpu.PrefetchScalarGridSpec(
            num_scalar_prefetch=0,
            grid=(ni, nk),
            in_specs=[pl.BlockSpec((M, tk), lambda i, k: (0, k))],  # one stream
            out_specs=pl.BlockSpec((tm, M), lambda i, k: (i, 0)),
        ),
        compiler_params=pltpu.CompilerParams(
            dimension_semantics=("parallel", "arbitrary"),
            vmem_limit_bytes=vmem_limit),
    )(features)


def _style_loss_call(features, style_gram, norm, *,
                     force_row_blocks=False, max_tk=None):
    """MSE(gram(features), style_gram) as a scalar float32 (Pallas)."""
    M, K = features.shape
    itemsize = features.dtype.itemsize
    s_itemsize = style_gram.dtype.itemsize
    budget, vmem_limit = _vmem_caps()
    inv_norm = 1.0 / float(norm)

    if not _use_row_blocks(M, force_row_blocks):
        residents = 3 * M * M * 4 + M * M * s_itemsize   # gram bufs + style scratch
        tk = _choose_tk(M, K, itemsize, residents, budget, max_tk)
        nk = pl.cdiv(K, tk)
        mask_tail = (K % tk) != 0
        kernel = functools.partial(_gram_loss_kernel, inv_norm=inv_norm,
                                   inv_mm=1.0 / float(M * M),
                                   k_total=K, tk=tk, mask_tail=mask_tail)

        def build(feat_spec):
            return pl.pallas_call(
                kernel,
                out_shape=(jax.ShapeDtypeStruct((M, M), jnp.float32),
                           jax.ShapeDtypeStruct((1, 1), jnp.float32)),
                grid_spec=pltpu.PrefetchScalarGridSpec(
                    num_scalar_prefetch=0,
                    grid=(nk,),
                    in_specs=[feat_spec,
                              pl.BlockSpec(memory_space=pl.ANY)],  # style: HBM
                    out_specs=[pl.BlockSpec((M, M), lambda k: (0, 0)),
                               # scalar loss in SMEM (no masked VMEM store)
                               pl.BlockSpec(memory_space=pltpu.MemorySpace.SMEM)],
                    scratch_shapes=[pltpu.VMEM((M, M), style_gram.dtype),
                                    pltpu.SemaphoreType.DMA((1,))],
                ),
                compiler_params=pltpu.CompilerParams(
                    dimension_semantics=("arbitrary",),
                    vmem_limit_bytes=vmem_limit),
            )(features, style_gram)

        _, loss = _call_with_feature_spec(build, (M, tk), lambda k: (0, k),
                                          want_deep=(M <= 128 and nk >= 3))
        return loss[0, 0]

    tm = _TM_ROWS
    ni = M // tm
    residents = 3 * tm * M * 4 + 2 * tm * M * s_itemsize
    tk = _choose_tk(M, K, itemsize, residents, budget, max_tk)
    nk = pl.cdiv(K, tk)
    mask_tail = (K % tk) != 0
    kernel = functools.partial(_gram_loss_rows_kernel, tm=tm, inv_norm=inv_norm,
                               k_total=K, tk=tk, mask_tail=mask_tail)
    _, part = pl.pallas_call(
        kernel,
        out_shape=(jax.ShapeDtypeStruct((M, M), jnp.float32),
                   jax.ShapeDtypeStruct((ni * 8, 128), jnp.float32)),
        grid_spec=pltpu.PrefetchScalarGridSpec(
            num_scalar_prefetch=0,
            grid=(ni, nk),
            in_specs=[pl.BlockSpec((M, tk), lambda i, k: (0, k)),   # one stream
                      pl.BlockSpec((tm, M), lambda i, k: (i, 0))],  # style slab
            out_specs=[pl.BlockSpec((tm, M), lambda i, k: (i, 0)),
                       pl.BlockSpec((8, 128), lambda i, k: (i, 0))],
        ),
        compiler_params=pltpu.CompilerParams(
            dimension_semantics=("parallel", "arbitrary"),
            vmem_limit_bytes=vmem_limit),
    )(features, style_gram)
    # One representative value per row block; finish the (tiny) mean here.
    return part[::8, 0].sum() / float(M * M)


# ---------------------------------------------------------------------------
# Public module-equivalent API.

def gram_pallas(x_nchw, *, force_row_blocks=False, max_tk=None):
    """StyleLoss.gram: view (a,b,c,d) -> (a*b, c*d), G = F F^T / (a*b*c*d)."""
    a, b, c, d = x_nchw.shape
    feats = x_nchw.reshape(a * b, c * d)
    return _gram_call(feats, a * b * c * d,
                      force_row_blocks=force_row_blocks, max_tk=max_tk)


def style_loss_forward(img_nchw, style_gram, *, force_row_blocks=False,
                       max_tk=None):
    """Equivalent of StyleLoss.forward: returns (img, loss)."""
    a, b, c, d = img_nchw.shape
    feats = img_nchw.reshape(a * b, c * d)
    loss = _style_loss_call(feats, style_gram, a * b * c * d,
                            force_row_blocks=force_row_blocks, max_tk=max_tk)
    return img_nchw, loss


def _ref_gram(x):
    a, b, c, d = x.shape
    f = x.reshape(a * b, c * d).astype(jnp.float32)
    return (f @ f.T) / (a * b * c * d)


if __name__ == "__main__":
    base_key = jax.random.PRNGKey(0)

    def check(shape, seed, *, force_row=False, max_tk=None,
              rtol=1e-5, atol=1e-6):
        ks, ki = jax.random.split(jax.random.fold_in(base_key, seed))
        style = jax.random.normal(ks, shape, dtype=jnp.float32)
        img = jax.random.normal(ki, shape, dtype=jnp.float32)

        style_gram = gram_pallas(style, force_row_blocks=force_row,
                                 max_tk=max_tk)                  # "__init__"
        out_img, loss = style_loss_forward(img, style_gram,
                                           force_row_blocks=force_row,
                                           max_tk=max_tk)        # "forward"
        jax.block_until_ready((out_img, loss))

        ref_style = _ref_gram(style)
        ref_loss = jnp.mean((_ref_gram(img) - ref_style) ** 2)
        assert jnp.allclose(out_img, img), "forward must return img unchanged"
        assert jnp.allclose(style_gram, ref_style, rtol=rtol, atol=atol), shape
        assert jnp.allclose(loss, ref_loss, rtol=rtol, atol=atol), (
            shape, float(loss), float(ref_loss))

    # Primary small shape consistent with the module (NCHW feature maps).
    check((2, 4, 16, 16), seed=0)
    # Odd K that fits in a single full-extent tile (no tail masking).
    check((1, 8, 48, 49), seed=1)
    # Multi-step K reduction with a masked final tile + overlapped style DMA
    # (tk forced small so the tail path and cross-step DMA are exercised).
    check((1, 8, 48, 49), seed=2, max_tk=256)
    # M = 512: 1-D path on single-TC chips, row-block path on 2-TC (v7x).
    check((2, 256, 8, 16), seed=3)
    # Row-block (megacore) kernels forced for coverage on any chip, with a
    # masked K tail and multiple K steps (correct everywhere, fast on v7x).
    check((2, 256, 40, 40), seed=4, force_row=True, max_tk=256)

    print("KERNEL_OK")
</pallas_src>

<mosaic_0001>
module attributes {stable_mosaic.version = 11 : i64} {
  func.func @_gram_kernel(%arg0: i32, %arg1: memref<8x256xf32, #tpu.memory_space<vmem>>, %arg2: memref<8x8xf32, #tpu.memory_space<vmem>>) attributes {dimension_semantics = [#tpu.dimension_semantics<arbitrary>], iteration_bounds = array<i64: 1>, scalar_prefetch = 0 : i64, scratch_operands = 0 : i64, tpu.core_type = #tpu.core_type<tc>, window_params = [{transform_indices = @transform_0, window_bounds = array<i64: 8, 256>}, {pipeline_mode = #tpu.pipeline_mode<synchronous>, transform_indices = @transform_1, window_bounds = array<i64: 8, 8>}]} {
    %c0_i32 = arith.constant 0 : i32
    %0 = arith.cmpi eq, %arg0, %c0_i32 : i32
    %1 = arith.extui %0 : i1 to i32
    %c0_i32_0 = arith.constant 0 : i32
    %2 = arith.cmpi ne, %1, %c0_i32_0 : i32
    scf.if %2 {
      %cst_8 = arith.constant 0.000000e+00 : f32
      %11 = vector.broadcast %cst_8 : f32 to vector<8x8xf32>
      %c0_9 = arith.constant 0 : index
      %c0_10 = arith.constant 0 : index
      %12 = vector.load %arg2[%c0_9, %c0_10] : memref<8x8xf32, #tpu.memory_space<vmem>>, vector<8x8xf32>
      tpu.vector_store %arg2[%c0_9, %c0_10], %11 {strides = array<i32>} : memref<8x8xf32, #tpu.memory_space<vmem>>, vector<8x8xf32>,
    } else {
    }
    %c0 = arith.constant 0 : index
    %c0_1 = arith.constant 0 : index
    %3 = vector.load %arg1[%c0, %c0_1] : memref<8x256xf32, #tpu.memory_space<vmem>>, vector<8x256xf32>
    %c0_2 = arith.constant 0 : index
    %c0_3 = arith.constant 0 : index
    %4 = vector.load %arg2[%c0_2, %c0_3] : memref<8x8xf32, #tpu.memory_space<vmem>>, vector<8x8xf32>
    %cst = arith.constant dense<0.000000e+00> : vector<8x8xf32>
    %5 = tpu.matmul %3, %3, %cst {dimension_numbers = #tpu.dot_dimension_numbers<[1], [1], [0], [0], [0, 0, 1, 0], [], []>} : vector<8x256xf32>, vector<8x256xf32>, vector<8x8xf32> -> vector<8x8xf32>
    %6 = arith.addf %4, %5 : vector<8x8xf32>
    %c0_4 = arith.constant 0 : index
    %c0_5 = arith.constant 0 : index
    %7 = vector.load %arg2[%c0_4, %c0_5] : memref<8x8xf32, #tpu.memory_space<vmem>>, vector<8x8xf32>
    tpu.vector_store %arg2[%c0_4, %c0_5], %6 {strides = array<i32>} : memref<8x8xf32, #tpu.memory_space<vmem>>, vector<8x8xf32>,
    %c0_i32_6 = arith.constant 0 : i32
    %8 = arith.cmpi eq, %arg0, %c0_i32_6 : i32
    %9 = arith.extui %8 : i1 to i32
    %c0_i32_7 = arith.constant 0 : i32
    %10 = arith.cmpi ne, %9, %c0_i32_7 : i32
    scf.if %10 {
      %c0_8 = arith.constant 0 : index
      %c0_9 = arith.constant 0 : index
      %11 = vector.load %arg2[%c0_8, %c0_9] : memref<8x8xf32, #tpu.memory_space<vmem>>, vector<8x8xf32>
      %cst_10 = arith.constant 4.8828125E-4 : f32
      %12 = vector.broadcast %cst_10 : f32 to vector<8x8xf32>
      %13 = arith.mulf %11, %12 : vector<8x8xf32>
      %c0_11 = arith.constant 0 : index
      %c0_12 = arith.constant 0 : index
      %14 = vector.load %arg2[%c0_11, %c0_12] : memref<8x8xf32, #tpu.memory_space<vmem>>, vector<8x8xf32>
      tpu.vector_store %arg2[%c0_11, %c0_12], %13 {strides = array<i32>} : memref<8x8xf32, #tpu.memory_space<vmem>>, vector<8x8xf32>,
    } else {
    }
    return
  }
  func.func @transform_0(%arg0: i32) -> (i32, i32) {
    %c0_i32 = arith.constant 0 : i32
    %c0_i32_0 = arith.constant 0 : i32
    return %c0_i32, %arg0 : i32, i32
  }
  func.func @transform_1(%arg0: i32) -> (i32, i32) {
    %c0_i32 = arith.constant 0 : i32
    %c0_i32_0 = arith.constant 0 : i32
    %c0_i32_1 = arith.constant 0 : i32
    return %c0_i32, %c0_i32_0 : i32, i32
  }
}

</mosaic_0001>

<llo_original>
// kernel: tpu_custom_call.1
$region0: #{tpu_custom_call.1}
  #allocation0 [shape = 'u32[]', space=smem, size = 0x4, offset = 0x4, fixed_abs, tag = 'smem constant byte address 0x4 - core index']
  #allocation1 [shape = 'u32[144,128]{1,0:T(1,128)}', space=vmem, size = 0x12000, scoped, tag = 'internal scratch']
  %s0 = inlined_call_operand.hbm [shape: f32[8,256], index: 0, kind: input, shape index: {}]
  %s1 = inlined_call_operand.hbm [shape: f32[8,8], index: 1, kind: output, shape index: {}]
  %s2 = sld [smem:[#allocation0]]
  $region26: #{tpu_custom_call.1} parent=0
    _
  %s4 = ssub.s32 1, %s2
  %s5 = scalar_select 0, %s4, %s2
  $region1: #{tpu_custom_call.1} parent=0
    #allocation2 [shape = 'u8[8192]{0}', space=vmem, size = 0x2000, scoped, tag = 'input window, operand 0, single buffered']
    #allocation3 [shape = 's32[1]{0}', space=sflag, size = 0x4, scoped, tag = 'scoped memory for tpu_custom_call.1']
    #allocation4 [shape = 's32[1]{0}', space=sflag, size = 0x4, scoped, tag = 'scoped memory for tpu_custom_call.1']
    #allocation5 [shape = 'u8[4096]{0}', space=vmem, size = 0x1000, scoped, tag = 'output window, operand 0, single buffered']
    %6 = vsyncpa [#allocation3], 0
    %7 = vsyncpa [#allocation4], 0
    // Predicated region
    $region2: #{tpu_custom_call.1} parent=1 // pred_check
      _
    $region3: #{tpu_custom_call.1} parent=1 // pred_check_branch
      %9 = sbr.rel (0) target = $region5
    $region4: #{tpu_custom_call.1} parent=1 // pred_region
      %s11 = ssub.s32 256, 256
      %12 = vsyncadd [#allocation3], %s11
      %s14 = sshll.u32 [#allocation2], 4
      %s15 = int_to_ptr.vmem [resolvable:$true] %s14
      %17 = dma.hbm_to_vmem [thread:$0]  %s0, 256, %s15, [#allocation3]
    $region5: #{tpu_custom_call.1} parent=1 // pred_fallthru
      _
    // Predicated region
    $region6: #{tpu_custom_call.1} parent=1 // pred_check
      _
    $region7: #{tpu_custom_call.1} parent=1 // pred_check_branch
      %19 = sbr.rel (0) target = $region9
    $region8: #{tpu_custom_call.1} parent=1 // pred_region
      %20 = dma.done [#allocation3], 256
    $region9: #{tpu_custom_call.1} parent=1 // pred_fallthru
      _
    %p21 = scmp.eq.s32.totalorder 0, 0
    // Predicated region
    $region10: #{tpu_custom_call.1} parent=1 // pred_check
      %p22 = pneg %p21
    $region11: #{tpu_custom_call.1} parent=1 // pred_check_branch
      %24 = sbr.rel (%p22) target = $region13
    $region12: #{tpu_custom_call.1} parent=1 // pred_region
      %vm25 = vcmask 64512
      %26 = vst.msk [vmem:[#allocation5] sm:$0xff] %vm25, 0.0
    $region13: #{tpu_custom_call.1} parent=1 // pred_fallthru
      _
    %v27 = vld [vmem:[#allocation2] sm:$0xff]
    %v28 = vld [vmem:[#allocation2 + $0x8] sm:$0xff]
    %v29 = vld [vmem:[#allocation5] sm:$0xff]
    %30 = vmatprep.subr.mxu0 %v28
    %31 = vmatpush1.xpose.msra.mxu0 %v27
    %32 = vmatprep.subr.mxu0 0.0
    %33 = vmatpush1.xpose.msra.mxu0 0.0
    %34 = vmatprep.subr.mxu0 0.0
    %35 = vmatpush1.xpose.msra.mxu0 0.0
    %36 = vmatprep.subr.mxu0 0.0
    %37 = vmatpush1.xpose.msra.mxu0 0.0
    %38 = vmatprep.subr.mxu0 0.0
    %39 = vmatpush1.xpose.msra.mxu0 0.0
    %40 = vmatprep.subr.mxu0 0.0
    %41 = vmatpush1.xpose.msra.mxu0 0.0
    %42 = vmatprep.subr.mxu0 0.0
    %43 = vmatpush1.xpose.msra.mxu0 0.0
    %44 = vmatprep.subr.mxu0 0.0
    %45 = vmatpush1.xpose.msra.mxu0 0.0
    %46 = vmatprep.subr.mxu0 0.0
    %47 = vmatpush1.xpose.msra.mxu0 0.0
    %48 = vmatprep.subr.mxu0 0.0
    %49 = vmatpush1.xpose.msra.mxu0 0.0
    %50 = vmatprep.subr.mxu0 0.0
    %51 = vmatpush1.xpose.msra.mxu0 0.0
    %52 = vmatprep.subr.mxu0 0.0
    %53 = vmatpush1.xpose.msra.mxu0 0.0
    %54 = vmatprep.subr.mxu0 0.0
    %55 = vmatpush1.xpose.msra.mxu0 0.0
    %56 = vmatprep.subr.mxu0 0.0
    %57 = vmatpush1.xpose.msra.mxu0 0.0
    %58 = vmatprep.subr.mxu0 0.0
    %59 = vmatpush1.xpose.msra.mxu0 0.0
    %60 = vmatprep.subr.mxu0 0.0
    %61 = vmatpush1.xpose.msra.mxu0 0.0
    %62 = vmatprep.subr.mxu0 0.0
    %63 = vmatpush1.xpose.msra.mxu0 0.0
    %64 = vmatprep.subr.mxu0 0.0
    %65 = vmatpush1.xpose.msra.mxu0 0.0
    %66 = vmatprep.subr.mxu0 0.0
    %67 = vmatpush1.xpose.msra.mxu0 0.0
    %68 = vmatprep.subr.mxu0 0.0
    %69 = vmatpush1.xpose.msra.mxu0 0.0
    %70 = vmatprep.subr.mxu0 0.0
    %71 = vmatpush1.xpose.msra.mxu0 0.0
    %72 = vmatprep.subr.mxu0 0.0
    %73 = vmatpush1.xpose.msra.mxu0 0.0
    %74 = vmatprep.subr.mxu0 0.0
    %75 = vmatpush1.xpose.msra.mxu0 0.0
    %76 = vmatprep.subr.mxu0 0.0
    %77 = vmatpush1.xpose.msra.mxu0 0.0
    %78 = vmatprep.subr.mxu0 0.0
    %79 = vmatpush1.xpose.msra.mxu0 0.0
    %80 = vmatprep.subr.mxu0 0.0
    %81 = vmatpush1.xpose.msra.mxu0 0.0
    %82 = vmatprep.subr.mxu0 0.0
    %83 = vmatpush1.xpose.msra.mxu0 0.0
    %84 = vmatprep.subr.mxu0 0.0
    %85 = vmatpush1.xpose.msra.mxu0 0.0
    %86 = vmatprep.subr.mxu0 0.0
    %87 = vmatpush1.xpose.msra.mxu0 0.0
    %88 = vmatprep.subr.mxu0 0.0
    %89 = vmatpush1.xpose.msra.mxu0 0.0
    %90 = vmatprep.subr.mxu0 0.0
    %91 = vmatpush1.xpose.msra.mxu0 0.0
    %92 = vmatprep.subr.mxu0 0.0
    %93 = vmatpush1.xpose.msra.mxu0 0.0
    %94 = vmatprep.mubr.f32.mxu0 %v28
    %95 = vmatmul.mubr.f32.gmra.mrb[0].mxu0 %v27
    %v96 = vpop.f32.mrb[0].mxu0
    %v97 = vadd.f32 0.0, %v96
    %v98 = vpop.f32.mrb[0].mxu0
    %99 = vdwg.mxu0
    %v100 = vadd.f32 %v29, %v97
    %vm101 = vcmask 64512
    %102 = vst.msk [vmem:[#allocation5] sm:$0xff] %vm101, %v100
    // Predicated region
    $region14: #{tpu_custom_call.1} parent=1 // pred_check
      %p103 = pneg %p21
    $region15: #{tpu_custom_call.1} parent=1 // pred_check_branch
      %105 = sbr.rel (%p103) target = $region17
    $region16: #{tpu_custom_call.1} parent=1 // pred_region
      %v106 = vld [vmem:[#allocation5] sm:$0xff]
      %v107 = vmul.f32 %v106, 0.00048828125
      %108 = vst.msk [vmem:[#allocation5] sm:$0xff] %vm101, %v107
    $region17: #{tpu_custom_call.1} parent=1 // pred_fallthru
      _
    // Predicated region
    $region18: #{tpu_custom_call.1} parent=1 // pred_check
      _
    $region19: #{tpu_custom_call.1} parent=1 // pred_check_branch
      %110 = sbr.rel (0) target = $region21
    $region20: #{tpu_custom_call.1} parent=1 // pred_region
      %s112 = ssub.s32 128, 128
      %113 = vsyncadd [#allocation4], %s112
      %s115 = sshll.u32 [#allocation5], 4
      %s116 = int_to_ptr.vmem [resolvable:$true] %s115
      %118 = dma.vmem_to_hbm [thread:$0]  %s116, 128, %s1, [#allocation4]
    $region21: #{tpu_custom_call.1} parent=1 // pred_fallthru
      _
    // Predicated region
    $region22: #{tpu_custom_call.1} parent=1 // pred_check
      _
    $region23: #{tpu_custom_call.1} parent=1 // pred_check_branch
      %120 = sbr.rel (0) target = $region25
    $region24: #{tpu_custom_call.1} parent=1 // pred_region
      %121 = dma.done [#allocation4], 128
    $region25: #{tpu_custom_call.1} parent=1 // pred_fallthru
      _
    %122 = vsyncpa [#allocation3], 1
    %123 = vsyncpa [#allocation4], 1

</llo_original>
